<compile_context>
chip_gen: v6e
topology: v6e:2x2x1
jax: 0.10.0
libtpu: 0.0.40
codegen_flags: <defaults>
</compile_context>

<pallas_src>
import functools

import jax
import jax.numpy as jnp
from jax import lax
from jax.experimental import pallas as pl
from jax.experimental.pallas import tpu as pltpu


def _instance_norm_kernel(x_ref, ss_ref, o_ref, *, eps):
    # x_ref:  (rows, HW)  one row per (n, c) instance, lanes = spatial
    # ss_ref: (rows, 2)   f32, [:, 0] = weight[c], [:, 1] = bias[c]
    # o_ref:  (rows, HW)
    x = x_ref[...].astype(jnp.float32)
    ss = ss_ref[...]

    hw = x.shape[-1]
    inv_n = 1.0 / float(hw)

    # One pass over x: sum and sum-of-squares (XLU lane reductions, f32 acc).
    mean = jnp.sum(x, axis=-1, keepdims=True) * inv_n
    mean_sq = jnp.sum(x * x, axis=-1, keepdims=True) * inv_n
    var = jnp.maximum(mean_sq - mean * mean, 0.0)  # clamp: padded rows / fp error

    # Fused affine: out = x * a + b   (per-row a, b computed once).
    a = lax.rsqrt(var + eps) * ss[:, 0:1]  # EUP rsqrt
    b = ss[:, 1:2] - mean * a

    o_ref[...] = (x * a + b).astype(o_ref.dtype)


def _round_up(x, m):
    return ((x + m - 1) // m) * m


def _vmem_capacity_bytes():
    try:
        info = pltpu.get_tpu_info()
        for attr in ("vmem_capacity_bytes", "vmem_size_bytes", "vmem_bytes"):
            v = getattr(info, attr, None)
            if v:
                return int(v)
    except Exception:
        pass
    return 64 << 20  # conservative default: v7x per-TensorCore VMEM


def _choose_block_rows(NC, HW, x_itemsize):
    # Sublane packing alignment by dtype width.
    sub = {4: 8, 2: 16, 1: 32}.get(int(x_itemsize), 8)

    vmem_cap = _vmem_capacity_bytes()
    # Budget for the whole pipelined footprint (2x x-buffers, 2x out-buffers,
    # f32 temps), leaving headroom for Mosaic scratch. Cap at ~48 MiB so tiles
    # sized on 128 MiB parts also fit v7x's 64 MiB.
    budget = min(int(vmem_cap * 0.45), 48 << 20)

    # Per-row bytes across the footprint:
    #   2 x-input buffers + 2 output buffers : 4 * HW * itemsize
    #   f32 upcast + fused-output temps      : ~2 * HW * 4
    #   scale/shift tile                     : ~2 * 2 * 4 * 2
    per_row = HW * (4 * x_itemsize + 8) + 32
    max_rows = max(sub, (budget // per_row) // sub * sub)

    block_rows = min(max_rows, _round_up(NC, sub))

    # Guarantee >= 2 grid steps when possible so the "parallel" axis can shard
    # across v7x's two TensorCores (no effect on single-TC v5e/v6e).
    if NC >= 2 * sub:
        block_rows = min(block_rows, _round_up(pl.cdiv(NC, 2), sub))

    return max(block_rows, sub)


def instance_normalization_forward(x, weight, bias, eps=1e-5):
    """Forward pass of InstanceNormalization.

    x:      (N, C, H, W)
    weight: (C,)  per-channel scale
    bias:   (C,)  per-channel shift
    Returns (N, C, H, W), same dtype as x.
    """
    N, C, H, W = x.shape
    HW = H * W
    NC = N * C

    # Lane-dense layout: one normalization instance per row, spatial on lanes.
    x2d = jnp.reshape(x, (NC, HW))

    # Merged per-row (scale, shift) columns: row r = n*C + c -> (weight[c], bias[c]).
    scale_shift = jnp.stack(
        [jnp.tile(weight.astype(jnp.float32), N),
         jnp.tile(bias.astype(jnp.float32), N)],
        axis=-1,
    )  # (NC, 2) f32

    x_itemsize = jnp.dtype(x.dtype).itemsize
    block_rows = _choose_block_rows(NC, HW, x_itemsize)
    grid = (pl.cdiv(NC, block_rows),)

    # VMEM limit derived from the actual pipelined footprint (+~25% headroom).
    x_block = block_rows * HW * x_itemsize
    out_block = block_rows * HW * x_itemsize
    ss_block = block_rows * 2 * 4
    f32_temps = 2 * block_rows * HW * 4
    footprint = 2 * (x_block + out_block + ss_block) + f32_temps
    vmem_limit = int(footprint * 1.25) + (1 << 20)
    vmem_limit = max(vmem_limit, 4 << 20)
    vmem_limit = min(vmem_limit, _vmem_capacity_bytes())

    out2d = pl.pallas_call(
        functools.partial(_instance_norm_kernel, eps=float(eps)),
        out_shape=jax.ShapeDtypeStruct((NC, HW), x.dtype),
        grid_spec=pltpu.PrefetchScalarGridSpec(
            num_scalar_prefetch=0,
            grid=grid,
            in_specs=[
                pl.BlockSpec((block_rows, HW), lambda i: (i, 0)),
                pl.BlockSpec((block_rows, 2), lambda i: (i, 0)),
            ],
            out_specs=pl.BlockSpec((block_rows, HW), lambda i: (i, 0)),
        ),
        compiler_params=pltpu.CompilerParams(
            dimension_semantics=("parallel",),
            vmem_limit_bytes=vmem_limit,
        ),
    )(x2d, scale_shift)

    return jnp.reshape(out2d, (N, C, H, W))


def init_params(key, dim):
    """Matches InstanceNormalization._reset_parameters: weight~U[0,1), bias=0."""
    return {
        "weight": jax.random.uniform(key, (dim,), jnp.float32, 0.0, 1.0),
        "bias": jnp.zeros((dim,), jnp.float32),
    }


if __name__ == "__main__":
    # Small shapes consistent with the module: NCHW = (2, 4, 16, 16).
    N, C, H, W = 2, 4, 16, 16
    eps = 1e-5

    key = jax.random.PRNGKey(0)
    kx, kp = jax.random.split(key)
    x = jax.random.normal(kx, (N, C, H, W), dtype=jnp.float32)
    params = init_params(kp, C)

    out = instance_normalization_forward(x, params["weight"], params["bias"], eps)
    out = jax.block_until_ready(out)

    # Pure-JAX reference (same math as the PyTorch module: biased variance).
    t = x.reshape(N, C, H * W)
    mean = jnp.mean(t, axis=2)
    var = jnp.mean((t - mean[:, :, None]) ** 2, axis=2)  # unbiased*(n-1)/n == biased
    ref = (x - mean[:, :, None, None]) / jnp.sqrt(var[:, :, None, None] + eps)
    ref = ref * params["weight"][None, :, None, None] + params["bias"][None, :, None, None]

    assert out.shape == x.shape
    assert jnp.allclose(out, ref, atol=1e-5, rtol=1e-5)

    print("KERNEL_OK")
</pallas_src>

<mosaic_0001>
module attributes {stable_mosaic.version = 11 : i64} {
  func.func @_instance_norm_kernel(%arg0: i32, %arg1: memref<8x256xf32, #tpu.memory_space<vmem>>, %arg2: memref<8x2xf32, #tpu.memory_space<vmem>>, %arg3: memref<8x256xf32, #tpu.memory_space<vmem>>) attributes {dimension_semantics = [#tpu.dimension_semantics<parallel>], iteration_bounds = array<i64: 1>, scalar_prefetch = 0 : i64, scratch_operands = 0 : i64, tpu.core_type = #tpu.core_type<tc>, window_params = [{transform_indices = @transform_0, window_bounds = array<i64: 8, 256>}, {transform_indices = @transform_1, window_bounds = array<i64: 8, 2>}, {transform_indices = @transform_2, window_bounds = array<i64: 8, 256>}]} {
    %c0 = arith.constant 0 : index
    %c0_0 = arith.constant 0 : index
    %0 = vector.load %arg1[%c0, %c0_0] : memref<8x256xf32, #tpu.memory_space<vmem>>, vector<8x256xf32>
    %c0_1 = arith.constant 0 : index
    %c0_2 = arith.constant 0 : index
    %1 = vector.load %arg2[%c0_1, %c0_2] : memref<8x2xf32, #tpu.memory_space<vmem>>, vector<8x2xf32>
    %cst = arith.constant dense<0.000000e+00> : vector<8xf32>
    %2 = vector.multi_reduction <add>, %0, %cst [1] : vector<8x256xf32> to vector<8xf32>
    %3 = vector.shape_cast %2 : vector<8xf32> to vector<8x1xf32>
    %cst_3 = arith.constant 3.906250e-03 : f32
    %4 = vector.broadcast %cst_3 : f32 to vector<8x1xf32>
    %5 = arith.mulf %3, %4 : vector<8x1xf32>
    %6 = arith.mulf %0, %0 : vector<8x256xf32>
    %cst_4 = arith.constant dense<0.000000e+00> : vector<8xf32>
    %7 = vector.multi_reduction <add>, %6, %cst_4 [1] : vector<8x256xf32> to vector<8xf32>
    %8 = vector.shape_cast %7 : vector<8xf32> to vector<8x1xf32>
    %cst_5 = arith.constant 3.906250e-03 : f32
    %9 = vector.broadcast %cst_5 : f32 to vector<8x1xf32>
    %10 = arith.mulf %8, %9 : vector<8x1xf32>
    %11 = arith.mulf %5, %5 : vector<8x1xf32>
    %12 = arith.subf %10, %11 : vector<8x1xf32>
    %cst_6 = arith.constant 0.000000e+00 : f32
    %13 = vector.broadcast %cst_6 : f32 to vector<8x1xf32>
    %14 = arith.maximumf %12, %13 : vector<8x1xf32>
    %cst_7 = arith.constant 9.99999974E-6 : f32
    %15 = vector.broadcast %cst_7 : f32 to vector<8x1xf32>
    %16 = arith.addf %14, %15 : vector<8x1xf32>
    %17 = math.rsqrt %16 : vector<8x1xf32>
    %18 = vector.extract_strided_slice %1 {offsets = [0, 0], sizes = [8, 1], strides = [1, 1]} : vector<8x2xf32> to vector<8x1xf32>
    %19 = arith.mulf %17, %18 : vector<8x1xf32>
    %20 = vector.extract_strided_slice %1 {offsets = [0, 1], sizes = [8, 1], strides = [1, 1]} : vector<8x2xf32> to vector<8x1xf32>
    %21 = arith.mulf %5, %19 : vector<8x1xf32>
    %22 = arith.subf %20, %21 : vector<8x1xf32>
    %23 = vector.broadcast %19 : vector<8x1xf32> to vector<8x256xf32>
    %24 = arith.mulf %0, %23 : vector<8x256xf32>
    %25 = vector.broadcast %22 : vector<8x1xf32> to vector<8x256xf32>
    %26 = arith.addf %24, %25 : vector<8x256xf32>
    %c0_8 = arith.constant 0 : index
    %c0_9 = arith.constant 0 : index
    %27 = vector.load %arg3[%c0_8, %c0_9] : memref<8x256xf32, #tpu.memory_space<vmem>>, vector<8x256xf32>
    tpu.vector_store %arg3[%c0_8, %c0_9], %26 {strides = array<i32>} : memref<8x256xf32, #tpu.memory_space<vmem>>, vector<8x256xf32>,
    return
  }
  func.func @transform_0(%arg0: i32) -> (i32, i32) {
    %c0_i32 = arith.constant 0 : i32
    %c0_i32_0 = arith.constant 0 : i32
    return %arg0, %c0_i32 : i32, i32
  }
  func.func @transform_1(%arg0: i32) -> (i32, i32) {
    %c0_i32 = arith.constant 0 : i32
    %c0_i32_0 = arith.constant 0 : i32
    return %arg0, %c0_i32 : i32, i32
  }
  func.func @transform_2(%arg0: i32) -> (i32, i32) {
    %c0_i32 = arith.constant 0 : i32
    %c0_i32_0 = arith.constant 0 : i32
    return %arg0, %c0_i32 : i32, i32
  }
}

</mosaic_0001>

<llo_original>
// kernel: tpu_custom_call.1
$region0: #{tpu_custom_call.1}
  #allocation0 [shape = 'u32[]', space=smem, size = 0x4, offset = 0x4, fixed_abs, tag = 'smem constant byte address 0x4 - core index']
  #allocation1 [shape = 'u32[144,128]{1,0:T(1,128)}', space=vmem, size = 0x12000, scoped, tag = 'internal scratch']
  %s0 = inlined_call_operand.hbm [shape: f32[8,256], index: 0, kind: input, shape index: {}]
  %s1 = inlined_call_operand.vmem [shape: f32[8,2], index: 1, kind: input, shape index: {}]
  %s2 = inlined_call_operand.hbm [shape: f32[8,256], index: 2, kind: output, shape index: {}]
  %s3 = sld [smem:[#allocation0]]
  $region22: #{tpu_custom_call.1} parent=0
    _
  %s5 = ssub.s32 1, %s3
  %s6 = scalar_select 0, %s5, %s3
  $region1: #{tpu_custom_call.1} parent=0
    #allocation2 [shape = 'u8[8192]{0}', space=vmem, size = 0x2000, scoped, tag = 'input window, operand 0, single buffered']
    #allocation3 [shape = 's32[1]{0}', space=sflag, size = 0x4, scoped, tag = 'scoped memory for tpu_custom_call.1']
    #allocation4 [shape = 's32[1]{0}', space=sflag, size = 0x4, scoped, tag = 'scoped memory for tpu_custom_call.1']
    #allocation5 [shape = 'u8[8192]{0}', space=vmem, size = 0x2000, scoped, tag = 'output window, operand 0, single buffered']
    %7 = vsyncpa [#allocation3], 0
    %8 = vsyncpa [#allocation4], 0
    // Predicated region
    $region2: #{tpu_custom_call.1} parent=1 // pred_check
      _
    $region3: #{tpu_custom_call.1} parent=1 // pred_check_branch
      %10 = sbr.rel (0) target = $region5
    $region4: #{tpu_custom_call.1} parent=1 // pred_region
      %s12 = ssub.s32 256, 256
      %13 = vsyncadd [#allocation3], %s12
      %s15 = sshll.u32 [#allocation2], 4
      %s16 = int_to_ptr.vmem [resolvable:$true] %s15
      %18 = dma.hbm_to_vmem [thread:$0]  %s0, 256, %s16, [#allocation3]
    $region5: #{tpu_custom_call.1} parent=1 // pred_fallthru
      _
    // Predicated region
    $region6: #{tpu_custom_call.1} parent=1 // pred_check
      _
    $region7: #{tpu_custom_call.1} parent=1 // pred_check_branch
      %20 = sbr.rel (0) target = $region9
    $region8: #{tpu_custom_call.1} parent=1 // pred_region
      _
    $region9: #{tpu_custom_call.1} parent=1 // pred_fallthru
      _
    // Predicated region
    $region10: #{tpu_custom_call.1} parent=1 // pred_check
      _
    $region11: #{tpu_custom_call.1} parent=1 // pred_check_branch
      %22 = sbr.rel (0) target = $region13
    $region12: #{tpu_custom_call.1} parent=1 // pred_region
      %23 = dma.done [#allocation3], 256
    $region13: #{tpu_custom_call.1} parent=1 // pred_fallthru
      _
    %v24 = vld [vmem:[#allocation2] sm:$0xff]
    %v25 = vld [vmem:[#allocation2 + $0x8] sm:$0xff]
    %v26 = vld [vmem:[%s1] sm:$0xff]
    %v27 = vadd.f32 %v24, %v25
    %28 = vadd.xlane.f32.xlu0 %v27
    %v29 = vpop.xlane.xlu0 %28
    %v30 = vmul.f32 %v29, 0.00390625
    %v31 = vmul.f32 %v24, %v24
    %v32 = vmul.f32 %v25, %v25
    %v33 = vadd.f32 %v31, %v32
    %34 = vadd.xlane.f32.xlu0 %v33
    %v35 = vpop.xlane.xlu0 %34
    %v36 = vmul.f32 %v35, 0.00390625
    %v37 = vmul.f32 %v30, %v30
    %v38 = vsub.f32 %v36, %v37
    %v39 = vmax.f32 %v38, 0.0
    %v40 = vadd.f32 %v39, 1e-05
    %v41 = vrsqrt.pop %v40
    %v42 = vmul.f32 %v41, %v26
    %v43 = vmul.f32 %v30, %v42
    %45 = vrot.lane.b32.xlu0 %v43, 1
    %v46 = vpop.permute.xlu0 %45
    %v48 = vsub.f32 %v26, %v46
    %50 = vset.pattern.permute.xlu0 0
    %51 = vperm.xlu0 %50, %v42
    %v52 = vpop.permute.xlu0 %51
    %v54 = vmul.f32 %v24, %v52
    %v55 = vmul.f32 %v25, %v52
    %57 = vset.pattern.permute.xlu0 1
    %58 = vperm.xlu0 %57, %v48
    %v59 = vpop.permute.xlu0 %58
    %v61 = vadd.f32 %v54, %v59
    %v62 = vadd.f32 %v55, %v59
    %63 = vst [vmem:[#allocation5] sm:$0xff] %v61
    %64 = vst [vmem:[#allocation5 + $0x8] sm:$0xff] %v62
    // Predicated region
    $region14: #{tpu_custom_call.1} parent=1 // pred_check
      _
    $region15: #{tpu_custom_call.1} parent=1 // pred_check_branch
      %66 = sbr.rel (0) target = $region17
    $region16: #{tpu_custom_call.1} parent=1 // pred_region
      %s68 = ssub.s32 256, 256
      %69 = vsyncadd [#allocation4], %s68
      %s71 = sshll.u32 [#allocation5], 4
      %s72 = int_to_ptr.vmem [resolvable:$true] %s71
      %74 = dma.vmem_to_hbm [thread:$0]  %s72, 256, %s2, [#allocation4]
    $region17: #{tpu_custom_call.1} parent=1 // pred_fallthru
      _
    // Predicated region
    $region18: #{tpu_custom_call.1} parent=1 // pred_check
      _
    $region19: #{tpu_custom_call.1} parent=1 // pred_check_branch
      %76 = sbr.rel (0) target = $region21
    $region20: #{tpu_custom_call.1} parent=1 // pred_region
      %77 = dma.done [#allocation4], 256
    $region21: #{tpu_custom_call.1} parent=1 // pred_fallthru
      _
    %78 = vsyncpa [#allocation3], 1
    %79 = vsyncpa [#allocation4], 1

</llo_original>
